<compile_context>
chip_gen: v5e
topology: v5e:2x2
jax: 0.10.0
libtpu: 0.0.40
codegen_flags: <defaults>
</compile_context>

<pallas_src>
import functools

import jax
import jax.numpy as jnp
from jax.experimental import pallas as pl
from jax.experimental.pallas import tpu as pltpu

IN_DIM = 768
HID_DIM = 512
ROW_ALIGN = 16                      # sublane alignment valid for both f32 (8) and bf16 (16) packing
VMEM_LIMIT_BYTES = 32 * 1024 * 1024  # headroom for larger tiles; <= scoped/physical on all gens


def critic_kernel(x_ref, w1_ref, b1_ref, w2_ref, b2_ref, o_ref):
    # x:  (TB, 768) bf16 (or f32)   w1: (768, 512) bf16   b1: (1, 512) f32
    # w2: (1, 512) f32              b2: (1, 1) f32        o : (1, TB) f32 (lane-dense row)
    x = x_ref[...]
    if x.dtype != jnp.bfloat16:      # trace-time branch; no-op when the caller already feeds bf16
        x = x.astype(jnp.bfloat16)
    h = jnp.dot(x, w1_ref[...], preferred_element_type=jnp.float32) + b1_ref[...]
    h = jnp.maximum(h, 0.0)          # ReLU
    # Dropout -> identity (eval mode)
    # Second layer (512 -> 1) as VPU multiply + lane reduction (keeps the MXU free of an N=1 matmul).
    col = jnp.sum(h * w2_ref[...], axis=-1, keepdims=True)            # (TB, 1), lane-sparse
    # Lane-dense store: transpose the tiny (TB, 1) column so the output block is a (1, TB) row
    # -> dense vector stores + dense writeback DMA instead of TB/8 masked partial stores.
    o_ref[...] = (jnp.transpose(col) + b2_ref[...]).astype(o_ref.dtype)


def _cdiv(a, b):
    return -(-a // b)


def _round_up(x, m):
    return _cdiv(x, m) * m


def _choose_tiles(B, tb):
    """Balanced batch tiling: minimal padding waste; >=2 tiles once the batch can be split
    (so the 'parallel' grid axis shards across both TensorCores on v7x)."""
    n = _cdiv(B, tb)
    if n < 2 and B >= 2 * ROW_ALIGN:
        n = 2
    TB = _round_up(_cdiv(B, n), ROW_ALIGN)
    n = max(_cdiv(B, TB), 1)
    if B >= 2 * ROW_ALIGN:
        n = max(n, 2)
    return TB, n


@functools.partial(jax.jit, static_argnames=("tb",))
def critic_forward(state, w1_bf16, b1, w2_row, b2, *, tb=1024):
    """state: (B, 768) bf16 preferred (f32 also accepted; cast happens in-kernel);
    w1_bf16: (768, 512) bf16; b1: (1, 512) f32;
    w2_row: (1, 512) f32 (row view of the (512, 1) Linear weight); b2: (1, 1) f32."""
    B = state.shape[0]
    TB, n_tiles = _choose_tiles(B, tb)
    Bp = TB * n_tiles
    if Bp != B:
        state = jnp.pad(state, ((0, Bp - B), (0, 0)))

    x_bytes = Bp * IN_DIM * jnp.dtype(state.dtype).itemsize
    cost = pl.CostEstimate(
        flops=2 * Bp * IN_DIM * HID_DIM + 3 * Bp * HID_DIM,
        transcendentals=0,
        bytes_accessed=(x_bytes                  # x stream (bf16 preferred)
                        + 2 * IN_DIM * HID_DIM   # w1 (bf16)
                        + 4 * HID_DIM            # b1
                        + 4 * HID_DIM            # w2 row
                        + 4                      # b2
                        + 4 * Bp),               # out
    )

    out = pl.pallas_call(
        critic_kernel,
        out_shape=jax.ShapeDtypeStruct((n_tiles, TB), jnp.float32),
        grid_spec=pltpu.PrefetchScalarGridSpec(
            num_scalar_prefetch=0,
            grid=(n_tiles,),
            in_specs=[
                pl.BlockSpec((TB, IN_DIM), lambda i: (i, 0)),       # x tile (pipelined)
                pl.BlockSpec((IN_DIM, HID_DIM), lambda i: (0, 0)),  # w1 VMEM-resident
                pl.BlockSpec((1, HID_DIM), lambda i: (0, 0)),       # b1 resident
                pl.BlockSpec((1, HID_DIM), lambda i: (0, 0)),       # w2 row resident
                pl.BlockSpec((1, 1), lambda i: (0, 0)),             # b2 resident
            ],
            out_specs=pl.BlockSpec((1, TB), lambda i: (i, 0)),      # lane-dense row per tile
        ),
        compiler_params=pltpu.CompilerParams(
            dimension_semantics=("parallel",),
            vmem_limit_bytes=VMEM_LIMIT_BYTES,
        ),
        cost_estimate=cost,
    )(state, w1_bf16, b1, w2_row, b2)

    out = out.reshape(Bp)[:B]
    # .squeeze() -> matches PyTorch's squeeze ((B,) for B > 1; 0-d scalar if B == 1)
    return jnp.squeeze(out)


def init_params(key):
    # Deterministic init mimicking nn.Linear defaults (uniform +/- 1/sqrt(fan_in)).
    k1, k2, k3, k4 = jax.random.split(key, 4)
    lim1 = 1.0 / jnp.sqrt(IN_DIM)
    lim2 = 1.0 / jnp.sqrt(HID_DIM)
    w1 = jax.random.uniform(k1, (IN_DIM, HID_DIM), jnp.float32, -lim1, lim1)
    b1 = jax.random.uniform(k2, (1, HID_DIM), jnp.float32, -lim1, lim1)
    w2 = jax.random.uniform(k3, (HID_DIM, 1), jnp.float32, -lim2, lim2)
    b2 = jax.random.uniform(k4, (1, 1), jnp.float32, -lim2, lim2)
    # Kernel-friendly layouts: w1 in bf16 (halves the dominant weight DMA),
    # w2 as a (1, 512) row so the second layer is a VPU multiply + lane reduction.
    w1_bf16 = w1.astype(jnp.bfloat16)
    w2_row = jnp.reshape(w2, (1, HID_DIM))
    return w1_bf16, b1, w2_row, b2


if __name__ == "__main__":
    key = jax.random.PRNGKey(0)
    k_x, k_p = jax.random.split(key)
    B = 8
    # Upstream producer emits bf16 state (the cast is fused there); no extra HBM pass in the wrapper.
    state = jax.random.normal(k_x, (B, IN_DIM), jnp.float32).astype(jnp.bfloat16)
    w1_bf16, b1, w2_row, b2 = init_params(k_p)

    out = critic_forward(state, w1_bf16, b1, w2_row, b2)
    out = jax.block_until_ready(out)

    # Pure-JAX reference using the same bf16 inputs/weights with f32 accumulation.
    ref_h = jnp.maximum(
        jnp.dot(state, w1_bf16, preferred_element_type=jnp.float32) + b1, 0.0)
    ref = jnp.squeeze(jnp.sum(ref_h * w2_row, axis=-1, keepdims=True) + b2)

    assert out.shape == (B,), out.shape
    assert jnp.allclose(out, ref, atol=2e-3, rtol=2e-3), (out, ref)

    print("KERNEL_OK")
</pallas_src>

<mosaic_0001>
module attributes {stable_mosaic.version = 11 : i64} {
  func.func @critic_kernel(%arg0: i32, %arg1: memref<16x768xbf16, #tpu.memory_space<vmem>>, %arg2: memref<768x512xbf16, #tpu.memory_space<vmem>>, %arg3: memref<1x512xf32, #tpu.memory_space<vmem>>, %arg4: memref<1x512xf32, #tpu.memory_space<vmem>>, %arg5: memref<1x1xf32, #tpu.memory_space<vmem>>, %arg6: memref<1x16xf32, #tpu.memory_space<vmem>>) attributes {dimension_semantics = [#tpu.dimension_semantics<parallel>], iteration_bounds = array<i64: 1>, scalar_prefetch = 0 : i64, scratch_operands = 0 : i64, tpu.core_type = #tpu.core_type<tc>, window_params = [{transform_indices = @transform_0, window_bounds = array<i64: 16, 768>}, {pipeline_mode = #tpu.pipeline_mode<synchronous>, transform_indices = @transform_1, window_bounds = array<i64: 768, 512>}, {pipeline_mode = #tpu.pipeline_mode<synchronous>, transform_indices = @transform_2, window_bounds = array<i64: 1, 512>}, {pipeline_mode = #tpu.pipeline_mode<synchronous>, transform_indices = @transform_3, window_bounds = array<i64: 1, 512>}, {pipeline_mode = #tpu.pipeline_mode<synchronous>, transform_indices = @transform_4, window_bounds = array<i64: 1, 1>}, {transform_indices = @transform_5, window_bounds = array<i64: 1, 16>}]} {
    %c0 = arith.constant 0 : index
    %c0_0 = arith.constant 0 : index
    %0 = vector.load %arg1[%c0, %c0_0] : memref<16x768xbf16, #tpu.memory_space<vmem>>, vector<16x768xbf16>
    %c0_1 = arith.constant 0 : index
    %c0_2 = arith.constant 0 : index
    %1 = vector.load %arg2[%c0_1, %c0_2] : memref<768x512xbf16, #tpu.memory_space<vmem>>, vector<768x512xbf16>
    %cst = arith.constant dense<0.000000e+00> : vector<16x512xf32>
    %2 = tpu.matmul %0, %1, %cst {dimension_numbers = #tpu.dot_dimension_numbers<[1], [0], [0], [1], [0, 0, 1, 1], [], []>} : vector<16x768xbf16>, vector<768x512xbf16>, vector<16x512xf32> -> vector<16x512xf32>
    %c0_3 = arith.constant 0 : index
    %c0_4 = arith.constant 0 : index
    %3 = vector.load %arg3[%c0_3, %c0_4] : memref<1x512xf32, #tpu.memory_space<vmem>>, vector<1x512xf32>
    %4 = vector.broadcast %3 : vector<1x512xf32> to vector<16x512xf32>
    %5 = arith.addf %2, %4 : vector<16x512xf32>
    %cst_5 = arith.constant 0.000000e+00 : f32
    %6 = vector.broadcast %cst_5 : f32 to vector<16x512xf32>
    %7 = arith.maximumf %5, %6 : vector<16x512xf32>
    %c0_6 = arith.constant 0 : index
    %c0_7 = arith.constant 0 : index
    %8 = vector.load %arg4[%c0_6, %c0_7] : memref<1x512xf32, #tpu.memory_space<vmem>>, vector<1x512xf32>
    %9 = vector.broadcast %8 : vector<1x512xf32> to vector<16x512xf32>
    %10 = arith.mulf %7, %9 : vector<16x512xf32>
    %cst_8 = arith.constant dense<0.000000e+00> : vector<16xf32>
    %11 = vector.multi_reduction <add>, %10, %cst_8 [1] : vector<16x512xf32> to vector<16xf32>
    %12 = vector.shape_cast %11 : vector<16xf32> to vector<16x1xf32>
    %13 = tpu.transpose %12, [1, 0] : vector<16x1xf32> -> vector<1x16xf32>
    %c0_9 = arith.constant 0 : index
    %c0_10 = arith.constant 0 : index
    %14 = vector.load %arg5[%c0_9, %c0_10] : memref<1x1xf32, #tpu.memory_space<vmem>>, vector<1x1xf32>
    %15 = vector.broadcast %14 : vector<1x1xf32> to vector<1x16xf32>
    %16 = arith.addf %13, %15 : vector<1x16xf32>
    %c0_11 = arith.constant 0 : index
    %c0_12 = arith.constant 0 : index
    %17 = vector.load %arg6[%c0_11, %c0_12] : memref<1x16xf32, #tpu.memory_space<vmem>>, vector<1x16xf32>
    tpu.vector_store %arg6[%c0_11, %c0_12], %16 {strides = array<i32>} : memref<1x16xf32, #tpu.memory_space<vmem>>, vector<1x16xf32>,
    return
  }
  func.func @transform_0(%arg0: i32) -> (i32, i32) {
    %c0_i32 = arith.constant 0 : i32
    %c0_i32_0 = arith.constant 0 : i32
    return %arg0, %c0_i32 : i32, i32
  }
  func.func @transform_1(%arg0: i32) -> (i32, i32) {
    %c0_i32 = arith.constant 0 : i32
    %c0_i32_0 = arith.constant 0 : i32
    %c0_i32_1 = arith.constant 0 : i32
    return %c0_i32, %c0_i32_0 : i32, i32
  }
  func.func @transform_2(%arg0: i32) -> (i32, i32) {
    %c0_i32 = arith.constant 0 : i32
    %c0_i32_0 = arith.constant 0 : i32
    %c0_i32_1 = arith.constant 0 : i32
    return %c0_i32, %c0_i32_0 : i32, i32
  }
  func.func @transform_3(%arg0: i32) -> (i32, i32) {
    %c0_i32 = arith.constant 0 : i32
    %c0_i32_0 = arith.constant 0 : i32
    %c0_i32_1 = arith.constant 0 : i32
    return %c0_i32, %c0_i32_0 : i32, i32
  }
  func.func @transform_4(%arg0: i32) -> (i32, i32) {
    %c0_i32 = arith.constant 0 : i32
    %c0_i32_0 = arith.constant 0 : i32
    %c0_i32_1 = arith.constant 0 : i32
    return %c0_i32, %c0_i32_0 : i32, i32
  }
  func.func @transform_5(%arg0: i32) -> (i32, i32) {
    %c0_i32 = arith.constant 0 : i32
    %c0_i32_0 = arith.constant 0 : i32
    return %arg0, %c0_i32 : i32, i32
  }
}

</mosaic_0001>

<llo_original>
// kernel: critic_forward.1
$region0: #{critic_forward.1}
  #allocation0 [shape = 'u32[]', space=smem, size = 0x4, offset = 0x4, fixed_abs, tag = 'smem constant byte address 0x4 - core index']
  #allocation1 [shape = 'u32[72,128]{1,0:T(1,128)}', space=vmem, size = 0x9000, scoped, tag = 'internal scratch']
  #allocation2 [shape = 'f32[1,1]{1,0:T(1,128)S(1)}', space=vmem, size = 0x200, scoped, tag = 'scoped memory for critic_forward.1']
  %s0 = inlined_call_operand.vmem [shape: bf16[16,768], index: 0, kind: input, shape index: {}]
  %s1 = inlined_call_operand.hbm [shape: bf16[768,512], index: 1, kind: input, shape index: {}]
  %s2 = inlined_call_operand.vmem [shape: f32[1,512], index: 2, kind: input, shape index: {}]
  %s3 = inlined_call_operand.vmem [shape: f32[1,512], index: 3, kind: input, shape index: {}]
  %s4 = inlined_call_operand.<no memory space> [shape: f32[1,1], index: 4, kind: input, shape index: {}]
  %s5 = inlined_call_operand.vmem [shape: f32[1,16], index: 5, kind: output, shape index: {}]
  %s6 = sld [smem:[#allocation0]]
  $region34: #{critic_forward.1} parent=0
    _
  %s8 = ssub.s32 1, %s6
  %s9 = scalar_select 0, %s8, %s6
  %v10 = vstv %s4
  %11 = vst [vmem:[#allocation2] sm:$0x1] %v10
  $region1: #{critic_forward.1} parent=0
    #allocation3 [shape = 'u8[786432]{0}', space=vmem, size = 0xc0000, scoped, tag = 'input window, operand 1, single buffered']
    #allocation4 [shape = 's32[1]{0}', space=sflag, size = 0x4, scoped, tag = 'scoped memory for critic_forward.1']
    %12 = vsyncpa [#allocation4], 0
    // Predicated region
    $region2: #{critic_forward.1} parent=1 // pred_check
      _
    $region3: #{critic_forward.1} parent=1 // pred_check_branch
      %14 = sbr.rel (0) target = $region5
    $region4: #{critic_forward.1} parent=1 // pred_region
      _
    $region5: #{critic_forward.1} parent=1 // pred_fallthru
      _
    // Predicated region
    $region6: #{critic_forward.1} parent=1 // pred_check
      _
    $region7: #{critic_forward.1} parent=1 // pred_check_branch
      %16 = sbr.rel (0) target = $region9
    $region8: #{critic_forward.1} parent=1 // pred_region
      %18 = vsyncadd [#allocation4], 0
      %s19 = sshll.u32 %s1, 4
      %s20 = int_to_ptr.hbm [resolvable:$true] %s19
      %s21 = sshll.u32 [#allocation3], 4
      %s22 = int_to_ptr.vmem [resolvable:$true] %s21
      %27 = dma.hbm_to_vmem [thread:$0]  %s20, 24576, %s22, [#allocation4], 256, 256, 16
    $region9: #{critic_forward.1} parent=1 // pred_fallthru
      _
    // Predicated region
    $region10: #{critic_forward.1} parent=1 // pred_check
      _
    $region11: #{critic_forward.1} parent=1 // pred_check_branch
      %29 = sbr.rel (0) target = $region13
    $region12: #{critic_forward.1} parent=1 // pred_region
      _
    $region13: #{critic_forward.1} parent=1 // pred_fallthru
      _
    // Predicated region
    $region14: #{critic_forward.1} parent=1 // pred_check
      _
    $region15: #{critic_forward.1} parent=1 // pred_check_branch
      %31 = sbr.rel (0) target = $region17
    $region16: #{critic_forward.1} parent=1 // pred_region
      _
    $region17: #{critic_forward.1} parent=1 // pred_fallthru
      _
    // Predicated region
    $region18: #{critic_forward.1} parent=1 // pred_check
      _
    $region19: #{critic_forward.1} parent=1 // pred_check_branch
      %33 = sbr.rel (0) target = $region21
    $region20: #{critic_forward.1} parent=1 // pred_region
      _
    $region21: #{critic_forward.1} parent=1 // pred_fallthru
      _
    // Predicated region
    $region22: #{critic_forward.1} parent=1 // pred_check
      _
    $region23: #{critic_forward.1} parent=1 // pred_check_branch
      %35 = sbr.rel (0) target = $region25
    $region24: #{critic_forward.1} parent=1 // pred_region
      %37 = dma.done [#allocation4], 24576
    $region25: #{critic_forward.1} parent=1 // pred_fallthru
      _
    %v38 = vld [vmem:[%s0] sm:$0xff]
    %v39 = vld [vmem:[%s0 + $0x8] sm:$0xff]
    %v40 = vld [vmem:[%s0 + $0x10] sm:$0xff]
    %v41 = vld [vmem:[%s0 + $0x18] sm:$0xff]
    %v42 = vld [vmem:[%s0 + $0x20] sm:$0xff]
    %v43 = vld [vmem:[%s0 + $0x28] sm:$0xff]
    %v44 = vld [vmem:[#allocation3] sm:$0xff]
    %v45 = vld [vmem:[#allocation3 + $0x8] sm:$0xff]
    %v46 = vld [vmem:[#allocation3 + $0x10] sm:$0xff]
    %v47 = vld [vmem:[#allocation3 + $0x18] sm:$0xff]
    %v48 = vld [vmem:[#allocation3 + $0x20] sm:$0xff]
    %v49 = vld [vmem:[#allocation3 + $0x28] sm:$0xff]
    %v50 = vld [vmem:[#allocation3 + $0x30] sm:$0xff]
    %v51 = vld [vmem:[#allocation3 + $0x38] sm:$0xff]
    %v52 = vld [vmem:[#allocation3 + $0x40] sm:$0xff]
    %v53 = vld [vmem:[#allocation3 + $0x48] sm:$0xff]
    %v54 = vld [vmem:[#allocation3 + $0x50] sm:$0xff]
    %v55 = vld [vmem:[#allocation3 + $0x58] sm:$0xff]
    %v56 = vld [vmem:[#allocation3 + $0x60] sm:$0xff]
    %v57 = vld [vmem:[#allocation3 + $0x68] sm:$0xff]
    %v58 = vld [vmem:[#allocation3 + $0x70] sm:$0xff]
    %v59 = vld [vmem:[#allocation3 + $0x78] sm:$0xff]
    %v60 = vld [vmem:[#allocation3 + $0x80] sm:$0xff]
    %v61 = vld [vmem:[#allocation3 + $0x88] sm:$0xff]
    %v62 = vld [vmem:[#allocation3 + $0x90] sm:$0xff]
    %v63 = vld [vmem:[#allocation3 + $0x98] sm:$0xff]
    %v64 = vld [vmem:[#allocation3 + $0xa0] sm:$0xff]
    %v65 = vld [vmem:[#allocation3 + $0xa8] sm:$0xff]
    %v66 = vld [vmem:[#allocation3 + $0xb0] sm:$0xff]
    %v67 = vld [vmem:[#allocation3 + $0xb8] sm:$0xff]
    %v68 = vld [vmem:[#allocation3 + $0xc0] sm:$0xff]
    %v69 = vld [vmem:[#allocation3 + $0xc8] sm:$0xff]
    %v70 = vld [vmem:[#allocation3 + $0xd0] sm:$0xff]
    %v71 = vld [vmem:[#allocation3 + $0xd8] sm:$0xff]
    %v72 = vld [vmem:[#allocation3 + $0xe0] sm:$0xff]
    %v73 = vld [vmem:[#allocation3 + $0xe8] sm:$0xff]
    %v74 = vld [vmem:[#allocation3 + $0xf0] sm:$0xff]
    %v75 = vld [vmem:[#allocation3 + $0xf8] sm:$0xff]
    %v76 = vld [vmem:[#allocation3 + $0x100] sm:$0xff]
    %v77 = vld [vmem:[#allocation3 + $0x108] sm:$0xff]
    %v78 = vld [vmem:[#allocation3 + $0x110] sm:$0xff]
    %v79 = vld [vmem:[#allocation3 + $0x118] sm:$0xff]
    %v80 = vld [vmem:[#allocation3 + $0x120] sm:$0xff]
    %v81 = vld [vmem:[#allocation3 + $0x128] sm:$0xff]
    %v82 = vld [vmem:[#allocation3 + $0x130] sm:$0xff]
    %v83 = vld [vmem:[#allocation3 + $0x138] sm:$0xff]
    %v84 = vld [vmem:[#allocation3 + $0x140] sm:$0xff]
    %v85 = vld [vmem:[#allocation3 + $0x148] sm:$0xff]
    %v86 = vld [vmem:[#allocation3 + $0x150] sm:$0xff]
    %v87 = vld [vmem:[#allocation3 + $0x158] sm:$0xff]
    %v88 = vld [vmem:[#allocation3 + $0x160] sm:$0xff]
    %v89 = vld [vmem:[#allocation3 + $0x168] sm:$0xff]
    %v90 = vld [vmem:[#allocation3 + $0x170] sm:$0xff]
    %v91 = vld [vmem:[#allocation3 + $0x178] sm:$0xff]
    %v92 = vld [vmem:[#allocation3 + $0x180] sm:$0xff]
    %v93 = vld [vmem:[#allocation3 + $0x188] sm:$0xff]
    %v94 = vld [vmem:[#allocation3 + $0x190] sm:$0xff]
    %v95 = vld [vmem:[#allocation3 + $0x198] sm:$0xff]
    %v96 = vld [vmem:[#allocation3 + $0x1a0] sm:$0xff]
    %v97 = vld [vmem:[#allocation3 + $0x1a8] sm:$0xff]
    %v98 = vld [vmem:[#allocation3 + $0x1b0] sm:$0xff]
    %v99 = vld [vmem:[#allocation3 + $0x1b8] sm:$0xff]
    %v100 = vld [vmem:[#allocation3 + $0x1c0] sm:$0xff]
    %v101 = vld [vmem:[#allocation3 + $0x1c8] sm:$0xff]
    %v102 = vld [vmem:[#allocation3 + $0x1d0] sm:$0xff]
    %v103 = vld [vmem:[#allocation3 + $0x1d8] sm:$0xff]
    %v104 = vld [vmem:[#allocation3 + $0x1e0] sm:$0xff]
    %v105 = vld [vmem:[#allocation3 + $0x1e8] sm:$0xff]
    %v106 = vld [vmem:[#allocation3 + $0x1f0] sm:$0xff]
    %v107 = vld [vmem:[#allocation3 + $0x1f8] sm:$0xff]
    %v108 = vld [vmem:[#allocation3 + $0x200] sm:$0xff]
    %v109 = vld [vmem:[#allocation3 + $0x208] sm:$0xff]
    %v110 = vld [vmem:[#allocation3 + $0x210] sm:$0xff]
    %v111 = vld [vmem:[#allocation3 + $0x218] sm:$0xff]
    %v112 = vld [vmem:[#allocation3 + $0x220] sm:$0xff]
    %v113 = vld [vmem:[#allocation3 + $0x228] sm:$0xff]
    %v114 = vld [vmem:[#allocation3 + $0x230] sm:$0xff]
    %v115 = vld [vmem:[#allocation3 + $0x238] sm:$0xff]
    %v116 = vld [vmem:[#allocation3 + $0x240] sm:$0xff]
    %v117 = vld [vmem:[#allocation3 + $0x248] sm:$0xff]
    %v118 = vld [vmem:[#allocation3 + $0x250] sm:$0xff]
    %v119 = vld [vmem:[#allocation3 + $0x258] sm:$0xff]
    %v120 = vld [vmem:[#allocation3 + $0x260] sm:$0xff]
    %v121 = vld [vmem:[#allocation3 + $0x268] sm:$0xff]
    %v122 = vld [vmem:[#allocation3 + $0x270] sm:$0xff]
    %v123 = vld [vmem:[#allocation3 + $0x278] sm:$0xff]
    %v124 = vld [vmem:[#allocation3 + $0x280] sm:$0xff]
    %v125 = vld [vmem:[#allocation3 + $0x288] sm:$0xff]
    %v126 = vld [vmem:[#allocation3 + $0x290] sm:$0xff]
    %v127 = vld [vmem:[#allocation3 + $0x298] sm:$0xff]
    %v128 = vld [vmem:[#allocation3 + $0x2a0] sm:$0xff]
    %v129 = vld [vmem:[#allocation3 + $0x2a8] sm:$0xff]
    %v130 = vld [vmem:[#allocation3 + $0x2b0] sm:$0xff]
    %v131 = vld [vmem:[#allocation3 + $0x2b8] sm:$0xff]
    %v132 = vld [vmem:[#allocation3 + $0x2c0] sm:$0xff]
    %v133 = vld [vmem:[#allocation3 + $0x2c8] sm:$0xff]
    %v134 = vld [vmem:[#allocation3 + $0x2d0] sm:$0xff]
    %v135 = vld [vmem:[#allocation3 + $0x2d8] sm:$0xff]
    %v136 = vld [vmem:[#allocation3 + $0x2e0] sm:$0xff]
    %v137 = vld [vmem:[#allocation3 + $0x2e8] sm:$0xff]
    %v138 = vld [vmem:[#allocation3 + $0x2f0] sm:$0xff]
    %v139 = vld [vmem:[#allocation3 + $0x2f8] sm:$0xff]
    %v140 = vld [vmem:[#allocation3 + $0x300] sm:$0xff]
    %v141 = vld [vmem:[#allocation3 + $0x308] sm:$0xff]
    %v142 = vld [vmem:[#allocation3 + $0x310] sm:$0xff]
    %v143 = vld [vmem:[#allocation3 + $0x318] sm:$0xff]
    %v144 = vld [vmem:[#allocation3 + $0x320] sm:$0xff]
    %v145 = vld [vmem:[#allocation3 + $0x328] sm:$0xff]
    %v146 = vld [vmem:[#allocation3 + $0x330] sm:$0xff]
    %v147 = vld [vmem:[#allocation3 + $0x338] sm:$0xff]
    %v148 = vld [vmem:[#allocation3 + $0x340] sm:$0xff]
    %v149 = vld [vmem:[#allocation3 + $0x348] sm:$0xff]
    %v150 = vld [vmem:[#allocation3 + $0x350] sm:$0xff]
    %v151 = vld [vmem:[#allocation3 + $0x358] sm:$0xff]
    %v152 = vld [vmem:[#allocation3 + $0x360] sm:$0xff]
    %v153 = vld [vmem:[#allocation3 + $0x368] sm:$0xff]
    %v154 = vld [vmem:[#allocation3 + $0x370] sm:$0xff]
    %v155 = vld [vmem:[#allocation3 + $0x378] sm:$0xff]
    %v156 = vld [vmem:[#allocation3 + $0x380] sm:$0xff]
    %v157 = vld [vmem:[#allocation3 + $0x388] sm:$0xff]
    %v158 = vld [vmem:[#allocation3 + $0x390] sm:$0xff]
    %v159 = vld [vmem:[#allocation3 + $0x398] sm:$0xff]
    %v160 = vld [vmem:[#allocation3 + $0x3a0] sm:$0xff]
    %v161 = vld [vmem:[#allocation3 + $0x3a8] sm:$0xff]
    %v162 = vld [vmem:[#allocation3 + $0x3b0] sm:$0xff]
    %v163 = vld [vmem:[#allocation3 + $0x3b8] sm:$0xff]
    %v164 = vld [vmem:[#allocation3 + $0x3c0] sm:$0xff]
    %v165 = vld [vmem:[#allocation3 + $0x3c8] sm:$0xff]
    %v166 = vld [vmem:[#allocation3 + $0x3d0] sm:$0xff]
    %v167 = vld [vmem:[#allocation3 + $0x3d8] sm:$0xff]
    %v168 = vld [vmem:[#allocation3 + $0x3e0] sm:$0xff]
    %v169 = vld [vmem:[#allocation3 + $0x3e8] sm:$0xff]
    %v170 = vld [vmem:[#allocation3 + $0x3f0] sm:$0xff]
    %v171 = vld [vmem:[#allocation3 + $0x3f8] sm:$0xff]
    %v172 = vld [vmem:[#allocation3 + $0x400] sm:$0xff]
    %v173 = vld [vmem:[#allocation3 + $0x408] sm:$0xff]
    %v174 = vld [vmem:[#allocation3 + $0x410] sm:$0xff]
    %v175 = vld [vmem:[#allocation3 + $0x418] sm:$0xff]
    %v176 = vld [vmem:[#allocation3 + $0x420] sm:$0xff]
    %v177 = vld [vmem:[#allocation3 + $0x428] sm:$0xff]
    %v178 = vld [vmem:[#allocation3 + $0x430] sm:$0xff]
    %v179 = vld [vmem:[#allocation3 + $0x438] sm:$0xff]
    %v180 = vld [vmem:[#allocation3 + $0x440] sm:$0xff]
    %v181 = vld [vmem:[#allocation3 + $0x448] sm:$0xff]
    %v182 = vld [vmem:[#allocation3 + $0x450] sm:$0xff]
    %v183 = vld [vmem:[#allocation3 + $0x458] sm:$0xff]
    %v184 = vld [vmem:[#allocation3 + $0x460] sm:$0xff]
    %v185 = vld [vmem:[#allocation3 + $0x468] sm:$0xff]
    %v186 = vld [vmem:[#allocation3 + $0x470] sm:$0xff]
    %v187 = vld [vmem:[#allocation3 + $0x478] sm:$0xff]
    %v188 = vld [vmem:[#allocation3 + $0x480] sm:$0xff]
    %v189 = vld [vmem:[#allocation3 + $0x488] sm:$0xff]
    %v190 = vld [vmem:[#allocation3 + $0x490] sm:$0xff]
    %v191 = vld [vmem:[#allocation3 + $0x498] sm:$0xff]
    %v192 = vld [vmem:[#allocation3 + $0x4a0] sm:$0xff]
    %v193 = vld [vmem:[#allocation3 + $0x4a8] sm:$0xff]
    %v194 = vld [vmem:[#allocation3 + $0x4b0] sm:$0xff]
    %v195 = vld [vmem:[#allocation3 + $0x4b8] sm:$0xff]
    %v196 = vld [vmem:[#allocation3 + $0x4c0] sm:$0xff]
    %v197 = vld [vmem:[#allocation3 + $0x4c8] sm:$0xff]
    %v198 = vld [vmem:[#allocation3 + $0x4d0] sm:$0xff]
    %v199 = vld [vmem:[#allocation3 + $0x4d8] sm:$0xff]
    %v200 = vld [vmem:[#allocation3 + $0x4e0] sm:$0xff]
    %v201 = vld [vmem:[#allocation3 + $0x4e8] sm:$0xff]
    %v202 = vld [vmem:[#allocation3 + $0x4f0] sm:$0xff]
    %v203 = vld [vmem:[#allocation3 + $0x4f8] sm:$0xff]
    %v204 = vld [vmem:[#allocation3 + $0x500] sm:$0xff]
    %v205 = vld [vmem:[#allocation3 + $0x508] sm:$0xff]
    %v206 = vld [vmem:[#allocation3 + $0x510] sm:$0xff]
    %v207 = vld [vmem:[#allocation3 + $0x518] sm:$0xff]
    %v208 = vld [vmem:[#allocation3 + $0x520] sm:$0xff]
    %v209 = vld [vmem:[#allocation3 + $0x528] sm:$0xff]
    %v210 = vld [vmem:[#allocation3 + $0x530] sm:$0xff]
    %v211 = vld [vmem:[#allocation3 + $0x538] sm:$0xff]
    %v212 = vld [vmem:[#allocation3 + $0x540] sm:$0xff]
    %v213 = vld [vmem:[#allocation3 + $0x548] sm:$0xff]
    %v214 = vld [vmem:[#allocation3 + $0x550] sm:$0xff]
    %v215 = vld [vmem:[#allocation3 + $0x558] sm:$0xff]
    %v216 = vld [vmem:[#allocation3 + $0x560] sm:$0xff]
    %v217 = vld [vmem:[#allocation3 + $0x568] sm:$0xff]
    %v218 = vld [vmem:[#allocation3 + $0x570] sm:$0xff]
    %v219 = vld [vmem:[#allocation3 + $0x578] sm:$0xff]
    %v220 = vld [vmem:[#allocation3 + $0x580] sm:$0xff]
    %v221 = vld [vmem:[#allocation3 + $0x588] sm:$0xff]
    %v222 = vld [vmem:[#allocation3 + $0x590] sm:$0xff]
    %v223 = vld [vmem:[#allocation3 + $0x598] sm:$0xff]
    %v224 = vld [vmem:[#allocation3 + $0x5a0] sm:$0xff]
    %v225 = vld [vmem:[#allocation3 + $0x5a8] sm:$0xff]
    %v226 = vld [vmem:[#allocation3 + $0x5b0] sm:$0xff]
    %v227 = vld [vmem:[#allocation3 + $0x5b8] sm:$0xff]
    %v228 = vld [vmem:[#allocation3 + $0x5c0] sm:$0xff]
    %v229 = vld [vmem:[#allocation3 + $0x5c8] sm:$0xff]
    %v230 = vld [vmem:[#allocation3 + $0x5d0] sm:$0xff]
    %v231 = vld [vmem:[#allocation3 + $0x5d8] sm:$0xff]
    %v232 = vld [vmem:[#allocation3 + $0x5e0] sm:$0xff]
    %v233 = vld [vmem:[#allocation3 + $0x5e8] sm:$0xff]
    %v234 = vld [vmem:[#allocation3 + $0x5f0] sm:$0xff]
    %v235 = vld [vmem:[#allocation3 + $0x5f8] sm:$0xff]
    %v236 = vld [vmem:[%s2] sm:$0xf]
    %v238 = vperm.slane %v236, 0
    %v239 = vperm.slane %v236, 1
    %v240 = vperm.slane %v236, 2
    %v241 = vperm.slane %v236, 3
    %v252 = vunpack.c.l.b16 %v38
    %v253 = vunpack.c.h.b16 %v38
    %v254 = vunpack.c.l.b16 %v39
    %v255 = vunpack.c.h.b16 %v39
    %v256 = vunpack.c.l.b16 %v40
    %v257 = vunpack.c.h.b16 %v40
    %v258 = vunpack.c.l.b16 %v41
    %v259 = vunpack.c.h.b16 %v41
    %v260 = vunpack.c.l.b16 %v42
    %v261 = vunpack.c.h.b16 %v42
    %v262 = vunpack.c.l.b16 %v43
    %v263 = vunpack.c.h.b16 %v43
    %v264 = vpack.c.b16 %v258, %v252
    %v265 = vpack.c.b16 %v259, %v253
    %v266 = vpack.c.b16 %v260, %v254
    %v267 = vpack.c.b16 %v261, %v255
    %v268 = vpack.c.b16 %v262, %v256
    %v269 = vpack.c.b16 %v263, %v257
    %v468 = vunpack.c.l.b16 %v44
    %v469 = vunpack.c.h.b16 %v44
    %v470 = vunpack.c.l.b16 %v45
    %v471 = vunpack.c.h.b16 %v45
    %v472 = vunpack.c.l.b16 %v46
    %v473 = vunpack.c.h.b16 %v46
    %v474 = vunpack.c.l.b16 %v47
    %v475 = vunpack.c.h.b16 %v47
    %v476 = vunpack.c.l.b16 %v48
    %v477 = vunpack.c.h.b16 %v48
    %v478 = vunpack.c.l.b16 %v49
    %v479 = vunpack.c.h.b16 %v49
    %v480 = vunpack.c.l.b16 %v50
    %v481 = vunpack.c.h.b16 %v50
    %v482 = vunpack.c.l.b16 %v51
    %v483 = vunpack.c.h.b16 %v51
    %v484 = vunpack.c.l.b16 %v52
    %v485 = vunpack.c.h.b16 %v52
    %v486 = vunpack.c.l.b16 %v53
    %v487 = vunpack.c.h.b16 %v53
    %v488 = vunpack.c.l.b16 %v54
    %v489 = vunpack.c.h.b16 %v54
    %v490 = vunpack.c.l.b16 %v55
    %v491 = vunpack.c.h.b16 %v55
    %v492 = vunpack.c.l.b16 %v56
    %v493 = vunpack.c.h.b16 %v56
    %v494 = vunpack.c.l.b16 %v57
    %v495 = vunpack.c.h.b16 %v57
    %v496 = vunpack.c.l.b16 %v58
    %v497 = vunpack.c.h.b16 %v58
    %v498 = vunpack.c.l.b16 %v59
    %v499 = vunpack.c.h.b16 %v59
    %v500 = vunpack.c.l.b16 %v60
    %v501 = vunpack.c.h.b16 %v60
    %v502 = vunpack.c.l.b16 %v61
    %v503 = vunpack.c.h.b16 %v61
    %v504 = vunpack.c.l.b16 %v62
    %v505 = vunpack.c.h.b16 %v62
    %v506 = vunpack.c.l.b16 %v63
    %v507 = vunpack.c.h.b16 %v63
    %v508 = vunpack.c.l.b16 %v64
    %v509 = vunpack.c.h.b16 %v64
    %v510 = vunpack.c.l.b16 %v65
    %v511 = vunpack.c.h.b16 %v65
    %v512 = vunpack.c.l.b16 %v66
    %v513 = vunpack.c.h.b16 %v66
    %v514 = vunpack.c.l.b16 %v67
    %v515 = vunpack.c.h.b16 %v67
    %v516 = vunpack.c.l.b16 %v68
    %v517 = vunpack.c.h.b16 %v68
    %v518 = vunpack.c.l.b16 %v69
    %v519 = vunpack.c.h.b16 %v69
    %v520 = vunpack.c.l.b16 %v70
    %v521 = vunpack.c.h.b16 %v70
    %v522 = vunpack.c.l.b16 %v71
    %v523 = vunpack.c.h.b16 %v71
    %v524 = vunpack.c.l.b16 %v72
    %v525 = vunpack.c.h.b16 %v72
    %v526 = vunpack.c.l.b16 %v73
    %v527 = vunpack.c.h.b16 %v73
    %v528 = vunpack.c.l.b16 %v74
    %v529 = vunpack.c.h.b16 %v74
    %v530 = vunpack.c.l.b16 %v75
    %v531 = vunpack.c.h.b16 %v75
    %v532 = vunpack.c.l.b16 %v76
    %v533 = vunpack.c.h.b16 %v76
    %v534 = vunpack.c.l.b16 %v77
    %v535 = vunpack.c.h.b16 %v77
    %v536 = vunpack.c.l.b16 %v78
    %v537 = vunpack.c.h.b16 %v78
    %v538 = vunpack.c.l.b16 %v79
    %v539 = vunpack.c.h.b16 %v79
    %v540 = vunpack.c.l.b16 %v80
    %v541 = vunpack.c.h.b16 %v80
    %v542 = vunpack.c.l.b16 %v81
    %v543 = vunpack.c.h.b16 %v81
    %v544 = vunpack.c.l.b16 %v82
    %v545 = vunpack.c.h.b16 %v82
    %v546 = vunpack.c.l.b16 %v83
    %v547 = vunpack.c.h.b16 %v83
    %v548 = vunpack.c.l.b16 %v84
    %v549 = vunpack.c.h.b16 %v84
    %v550 = vunpack.c.l.b16 %v85
    %v551 = vunpack.c.h.b16 %v85
    %v552 = vunpack.c.l.b16 %v86
    %v553 = vunpack.c.h.b16 %v86
    %v554 = vunpack.c.l.b16 %v87
    %v555 = vunpack.c.h.b16 %v87
    %v556 = vunpack.c.l.b16 %v88
    %v557 = vunpack.c.h.b16 %v88
    %v558 = vunpack.c.l.b16 %v89
    %v559 = vunpack.c.h.b16 %v89
    %v560 = vunpack.c.l.b16 %v90
    %v561 = vunpack.c.h.b16 %v90
    %v562 = vunpack.c.l.b16 %v91
    %v563 = vunpack.c.h.b16 %v91
    %v564 = vunpack.c.l.b16 %v92
    %v565 = vunpack.c.h.b16 %v92
    %v566 = vunpack.c.l.b16 %v93
    %v567 = vunpack.c.h.b16 %v93
    %v568 = vunpack.c.l.b16 %v94
    %v569 = vunpack.c.h.b16 %v94
    %v570 = vunpack.c.l.b16 %v95
    %v571 = vunpack.c.h.b16 %v95
    %v572 = vunpack.c.l.b16 %v96
    %v573 = vunpack.c.h.b16 %v96
    %v574 = vunpack.c.l.b16 %v97
    %v575 = vunpack.c.h.b16 %v97
    %v576 = vunpack.c.l.b16 %v98
    %v577 = vunpack.c.h.b16 %v98
    %v578 = vunpack.c.l.b16 %v99
    %v579 = vunpack.c.h.b16 %v99
    %v580 = vunpack.c.l.b16 %v100
    %v581 = vunpack.c.h.b16 %v100
    %v582 = vunpack.c.l.b16 %v101
    %v583 = vunpack.c.h.b16 %v101
    %v584 = vunpack.c.l.b16 %v102
    %v585 = vunpack.c.h.b16 %v102
    %v586 = vunpack.c.l.b16 %v103
    %v587 = vunpack.c.h.b16 %v103
    %v588 = vunpack.c.l.b16 %v104
    %v589 = vunpack.c.h.b16 %v104
    %v590 = vunpack.c.l.b16 %v105
    %v591 = vunpack.c.h.b16 %v105
    %v592 = vunpack.c.l.b16 %v106
    %v593 = vunpack.c.h.b16 %v106
    %v594 = vunpack.c.l.b16 %v107
    %v595 = vunpack.c.h.b16 %v107
    %v596 = vunpack.c.l.b16 %v108
    %v597 = vunpack.c.h.b16 %v108
    %v598 = vunpack.c.l.b16 %v109
    %v599 = vunpack.c.h.b16 %v109
    %v600 = vunpack.c.l.b16 %v110
    %v601 = vunpack.c.h.b16 %v110
    %v602 = vunpack.c.l.b16 %v111
    %v603 = vunpack.c.h.b16 %v111
    %v604 = vunpack.c.l.b16 %v112
    %v605 = vunpack.c.h.b16 %v112
    %v606 = vunpack.c.l.b16 %v113
    %v607 = vunpack.c.h.b16 %v113
    %v608 = vunpack.c.l.b16 %v114
    %v609 = vunpack.c.h.b16 %v114
    %v610 = vunpack.c.l.b16 %v115
    %v611 = vunpack.c.h.b16 %v115
    %v612 = vunpack.c.l.b16 %v116
    %v613 = vunpack.c.h.b16 %v116
    %v614 = vunpack.c.l.b16 %v117
    %v615 = vunpack.c.h.b16 %v117
    %v616 = vunpack.c.l.b16 %v118
    %v617 = vunpack.c.h.b16 %v118
    %v618 = vunpack.c.l.b16 %v119
    %v619 = vunpack.c.h.b16 %v119
    %v620 = vunpack.c.l.b16 %v120
    %v621 = vunpack.c.h.b16 %v120
    %v622 = vunpack.c.l.b16 %v121
    %v623 = vunpack.c.h.b16 %v121
    %v624 = vunpack.c.l.b16 %v122
    %v625 = vunpack.c.h.b16 %v122
    %v626 = vunpack.c.l.b16 %v123
    %v627 = vunpack.c.h.b16 %v123
    %v628 = vunpack.c.l.b16 %v124
    %v629 = vunpack.c.h.b16 %v124
    %v630 = vunpack.c.l.b16 %v125
    %v631 = vunpack.c.h.b16 %v125
    %v632 = vunpack.c.l.b16 %v126
    %v633 = vunpack.c.h.b16 %v126
    %v634 = vunpack.c.l.b16 %v127
    %v635 = vunpack.c.h.b16 %v127
    %v636 = vunpack.c.l.b16 %v128
    %v637 = vunpack.c.h.b16 %v128
    %v638 = vunpack.c.l.b16 %v129
    %v639 = vunpack.c.h.b16 %v129
    %v640 = vunpack.c.l.b16 %v130
    %v641 = vunpack.c.h.b16 %v130
    %v642 = vunpack.c.l.b16 %v131
    %v643 = vunpack.c.h.b16 %v131
    %v644 = vunpack.c.l.b16 %v132
    %v645 = vunpack.c.h.b16 %v132
    %v646 = vunpack.c.l.b16 %v133
    %v647 = vunpack.c.h.b16 %v133
    %v648 = vunpack.c.l.b16 %v134
    %v649 = vunpack.c.h.b16 %v134
    %v650 = vunpack.c.l.b16 %v135
    %v651 = vunpack.c.h.b16 %v135
    %v652 = vunpack.c.l.b16 %v136
    %v653 = vunpack.c.h.b16 %v136
    %v654 = vunpack.c.l.b16 %v137
    %v655 = vunpack.c.h.b16 %v137
    %v656 = vunpack.c.l.b16 %v138
    %v657 = vunpack.c.h.b16 %v138
    %v658 = vunpack.c.l.b16 %v139
    %v659 = vunpack.c.h.b16 %v139
    %v660 = vunpack.c.l.b16 %v140
    %v661 = vunpack.c.h.b16 %v140
    %v662 = vunpack.c.l.b16 %v141
    %v663 = vunpack.c.h.b16 %v141
    %v664 = vunpack.c.l.b16 %v142
    %v665 = vunpack.c.h.b16 %v142
    %v666 = vunpack.c.l.b16 %v143
    %v667 = vunpack.c.h.b16 %v143
    %v668 = vunpack.c.l.b16 %v144
    %v669 = vunpack.c.h.b16 %v144
    %v670 = vunpack.c.l.b16 %v145
    %v671 = vunpack.c.h.b16 %v145
    %v672 = vunpack.c.l.b16 %v146
    %v673 = vunpack.c.h.b16 %v146
    %v674 = vunpack.c.l.b16 %v147
    %v675 = vunpack.c.h.b16 %v147
    %v676 = vunpack.c.l.b16 %v148
    %v677 = vunpack.c.h.b16 %v148
    %v678 = vunpack.c.l.b16 %v149
    %v679 = vunpack.c.h.b16 %v149
    %v680 = vunpack.c.l.b16 %v150
    %v681 = vunpack.c.h.b16 %v150
    %v682 = vunpack.c.l.b16 %v151
    %v683 = vunpack.c.h.b16 %v151
    %v684 = vunpack.c.l.b16 %v152
    %v685 = vunpack.c.h.b16 %v152
    %v686 = vunpack.c.l.b16 %v153
    %v687 = vunpack.c.h.b16 %v153
    %v688 = vunpack.c.l.b16 %v154
    %v689 = vunpack.c.h.b16 %v154
    %v690 = vunpack.c.l.b16 %v155
    %v691 = vunpack.c.h.b16 %v155
    %v692 = vunpack.c.l.b16 %v156
    %v693 = vunpack.c.h.b16 %v156
    %v694 = vunpack.c.l.b16 %v157
    %v695 = vunpack.c.h.b16 %v157
    %v696 = vunpack.c.l.b16 %v158
    %v697 = vunpack.c.h.b16 %v158
    %v698 = vunpack.c.l.b16 %v159
    %v699 = vunpack.c.h.b16 %v159
    %v700 = vunpack.c.l.b16 %v160
    %v701 = vunpack.c.h.b16 %v160
    %v702 = vunpack.c.l.b16 %v161
    %v703 = vunpack.c.h.b16 %v161
    %v704 = vunpack.c.l.b16 %v162
    %v705 = vunpack.c.h.b16 %v162
    %v706 = vunpack.c.l.b16 %v163
    %v707 = vunpack.c.h.b16 %v163
    %v708 = vunpack.c.l.b16 %v164
    %v709 = vunpack.c.h.b16 %v164
    %v710 = vunpack.c.l.b16 %v165
    %v711 = vunpack.c.h.b16 %v165
    %v712 = vunpack.c.l.b16 %v166
    %v713 = vunpack.c.h.b16 %v166
    %v714 = vunpack.c.l.b16 %v167
    %v715 = vunpack.c.h.b16 %v167
    %v716 = vunpack.c.l.b16 %v168
    %v717 = vunpack.c.h.b16 %v168
    %v718 = vunpack.c.l.b16 %v169
    %v719 = vunpack.c.h.b16 %v169
    %v720 = vunpack.c.l.b16 %v170
    %v721 = vunpack.c.h.b16 %v170
    %v722 = vunpack.c.l.b16 %v171
    %v723 = vunpack.c.h.b16 %v171
    %v724 = vunpack.c.l.b16 %v172
    %v725 = vunpack.c.h.b16 %v172
    %v726 = vunpack.c.l.b16 %v173
    %v727 = vunpack.c.h.b16 %v173
    %v728 = vunpack.c.l.b16 %v174
    %v729 = vunpack.c.h.b16 %v174
    %v730 = vunpack.c.l.b16 %v175
    %v731 = vunpack.c.h.b16 %v175
    %v732 = vunpack.c.l.b16 %v176
    %v733 = vunpack.c.h.b16 %v176
    %v734 = vunpack.c.l.b16 %v177
    %v735 = vunpack.c.h.b16 %v177
    %v736 = vunpack.c.l.b16 %v178
    %v737 = vunpack.c.h.b16 %v178
    %v738 = vunpack.c.l.b16 %v179
    %v739 = vunpack.c.h.b16 %v179
    %v740 = vunpack.c.l.b16 %v180
    %v741 = vunpack.c.h.b16 %v180
    %v742 = vunpack.c.l.b16 %v181
    %v743 = vunpack.c.h.b16 %v181
    %v744 = vunpack.c.l.b16 %v182
    %v745 = vunpack.c.h.b16 %v182
    %v746 = vunpack.c.l.b16 %v183
    %v747 = vunpack.c.h.b16 %v183
    %v748 = vunpack.c.l.b16 %v184
    %v749 = vunpack.c.h.b16 %v184
    %v750 = vunpack.c.l.b16 %v185
    %v751 = vunpack.c.h.b16 %v185
    %v752 = vunpack.c.l.b16 %v186
    %v753 = vunpack.c.h.b16 %v186
    %v754 = vunpack.c.l.b16 %v187
    %v755 = vunpack.c.h.b16 %v187
    %v756 = vunpack.c.l.b16 %v188
    %v757 = vunpack.c.h.b16 %v188
    %v758 = vunpack.c.l.b16 %v189
    %v759 = vunpack.c.h.b16 %v189
    %v760 = vunpack.c.l.b16 %v190
    %v761 = vunpack.c.h.b16 %v190
    %v762 = vunpack.c.l.b16 %v191
    %v763 = vunpack.c.h.b16 %v191
    %v764 = vunpack.c.l.b16 %v192
    %v765 = vunpack.c.h.b16 %v192
    %v766 = vunpack.c.l.b16 %v193
    %v767 = vunpack.c.h.b16 %v193
    %v768 = vunpack.c.l.b16 %v194
    %v769 = vunpack.c.h.b16 %v194
    %v770 = vunpack.c.l.b16 %v195
    %v771 = vunpack.c.h.b16 %v195
    %v772 = vunpack.c.l.b16 %v196
    %v773 = vunpack.c.h.b16 %v196
    %v774 = vunpack.c.l.b16 %v197
    %v775 = vunpack.c.h.b16 %v197
    %v776 = vunpack.c.l.b16 %v198
    %v777 = vunpack.c.h.b16 %v198
    %v778 = vunpack.c.l.b16 %v199
    %v779 = vunpack.c.h.b16 %v199
    %v780 = vunpack.c.l.b16 %v200
    %v781 = vunpack.c.h.b16 %v200
    %v782 = vunpack.c.l.b16 %v201
    %v783 = vunpack.c.h.b16 %v201
    %v784 = vunpack.c.l.b16 %v202
    %v785 = vunpack.c.h.b16 %v202
    %v786 = vunpack.c.l.b16 %v203
    %v787 = vunpack.c.h.b16 %v203
    %v788 = vunpack.c.l.b16 %v204
    %v789 = vunpack.c.h.b16 %v204
    %v790 = vunpack.c.l.b16 %v205
    %v791 = vunpack.c.h.b16 %v205
    %v792 = vunpack.c.l.b16 %v206
    %v793 = vunpack.c.h.b16 %v206
    %v794 = vunpack.c.l.b16 %v207
    %v795 = vunpack.c.h.b16 %v207
    %v796 = vunpack.c.l.b16 %v208
    %v797 = vunpack.c.h.b16 %v208
    %v798 = vunpack.c.l.b16 %v209
    %v799 = vunpack.c.h.b16 %v209
    %v800 = vunpack.c.l.b16 %v210
    %v801 = vunpack.c.h.b16 %v210
    %v802 = vunpack.c.l.b16 %v211
    %v803 = vunpack.c.h.b16 %v211
    %v804 = vunpack.c.l.b16 %v212
    %v805 = vunpack.c.h.b16 %v212
    %v806 = vunpack.c.l.b16 %v213
    %v807 = vunpack.c.h.b16 %v213
    %v808 = vunpack.c.l.b16 %v214
    %v809 = vunpack.c.h.b16 %v214
    %v810 = vunpack.c.l.b16 %v215
    %v811 = vunpack.c.h.b16 %v215
    %v812 = vunpack.c.l.b16 %v216
    %v813 = vunpack.c.h.b16 %v216
    %v814 = vunpack.c.l.b16 %v217
    %v815 = vunpack.c.h.b16 %v217
    %v816 = vunpack.c.l.b16 %v218
    %v817 = vunpack.c.h.b16 %v218
    %v818 = vunpack.c.l.b16 %v219
    %v819 = vunpack.c.h.b16 %v219
    %v820 = vunpack.c.l.b16 %v220
    %v821 = vunpack.c.h.b16 %v220
    %v822 = vunpack.c.l.b16 %v221
    %v823 = vunpack.c.h.b16 %v221
    %v824 = vunpack.c.l.b16 %v222
    %v825 = vunpack.c.h.b16 %v222
    %v826 = vunpack.c.l.b16 %v223
    %v827 = vunpack.c.h.b16 %v223
    %v828 = vunpack.c.l.b16 %v224
    %v829 = vunpack.c.h.b16 %v224
    %v830 = vunpack.c.l.b16 %v225
    %v831 = vunpack.c.h.b16 %v225
    %v832 = vunpack.c.l.b16 %v226
    %v833 = vunpack.c.h.b16 %v226
    %v834 = vunpack.c.l.b16 %v227
    %v835 = vunpack.c.h.b16 %v227
    %v836 = vunpack.c.l.b16 %v228
    %v837 = vunpack.c.h.b16 %v228
    %v838 = vunpack.c.l.b16 %v229
    %v839 = vunpack.c.h.b16 %v229
    %v840 = vunpack.c.l.b16 %v230
    %v841 = vunpack.c.h.b16 %v230
    %v842 = vunpack.c.l.b16 %v231
    %v843 = vunpack.c.h.b16 %v231
    %v844 = vunpack.c.l.b16 %v232
    %v845 = vunpack.c.h.b16 %v232
    %v846 = vunpack.c.l.b16 %v233
    %v847 = vunpack.c.h.b16 %v233
    %v848 = vunpack.c.l.b16 %v234
    %v849 = vunpack.c.h.b16 %v234
    %v850 = vunpack.c.l.b16 %v235
    %v851 = vunpack.c.h.b16 %v235
    %v852 = vpack.c.b16 %v472, %v468
    %v853 = vpack.c.b16 %v473, %v469
    %v854 = vpack.c.b16 %v474, %v470
    %v855 = vpack.c.b16 %v475, %v471
    %v856 = vpack.c.b16 %v480, %v476
    %v857 = vpack.c.b16 %v481, %v477
    %v858 = vpack.c.b16 %v482, %v478
    %v859 = vpack.c.b16 %v483, %v479
    %v860 = vpack.c.b16 %v488, %v484
    %v861 = vpack.c.b16 %v489, %v485
    %v862 = vpack.c.b16 %v490, %v486
    %v863 = vpack.c.b16 %v491, %v487
    %v864 = vpack.c.b16 %v496, %v492
    %v865 = vpack.c.b16 %v497, %v493
    %v866 = vpack.c.b16 %v498, %v494
    %v867 = vpack.c.b16 %v499, %v495
    %v868 = vpack.c.b16 %v504, %v500
    %v869 = vpack.c.b16 %v505, %v501
    %v870 = vpack.c.b16 %v506, %v502
    %v871 = vpack.c.b16 %v507, %v503
    %v872 = vpack.c.b16 %v512, %v508
    %v873 = vpack.c.b16 %v513, %v509
    %v874 = vpack.c.b16 %v514, %v510
    %v875 = vpack.c.b16 %v515, %v511
    %v876 = vpack.c.b16 %v520, %v516
    %v877 = vpack.c.b16 %v521, %v517
    %v878 = vpack.c.b16 %v522, %v518
    %v879 = vpack.c.b16 %v523, %v519
    %v880 = vpack.c.b16 %v528, %v524
    %v881 = vpack.c.b16 %v529, %v525
    %v882 = vpack.c.b16 %v530, %v526
    %v883 = vpack.c.b16 %v531, %v527
    %v884 = vpack.c.b16 %v536, %v532
    %v885 = vpack.c.b16 %v537, %v533
    %v886 = vpack.c.b16 %v538, %v534
    %v887 = vpack.c.b16 %v539, %v535
    %v888 = vpack.c.b16 %v544, %v540
    %v889 = vpack.c.b16 %v545, %v541
    %v890 = vpack.c.b16 %v546, %v542
    %v891 = vpack.c.b16 %v547, %v543
    %v892 = vpack.c.b16 %v552, %v548
    %v893 = vpack.c.b16 %v553, %v549
    %v894 = vpack.c.b16 %v554, %v550
    %v895 = vpack.c.b16 %v555, %v551
    %v896 = vpack.c.b16 %v560, %v556
    %v897 = vpack.c.b16 %v561, %v557
    %v898 = vpack.c.b16 %v562, %v558
    %v899 = vpack.c.b16 %v563, %v559
    %v900 = vpack.c.b16 %v568, %v564
    %v901 = vpack.c.b16 %v569, %v565
    %v902 = vpack.c.b16 %v570, %v566
    %v903 = vpack.c.b16 %v571, %v567
    %v904 = vpack.c.b16 %v576, %v572
    %v905 = vpack.c.b16 %v577, %v573
    %v906 = vpack.c.b16 %v578, %v574
    %v907 = vpack.c.b16 %v579, %v575
    %v908 = vpack.c.b16 %v584, %v580
    %v909 = vpack.c.b16 %v585, %v581
    %v910 = vpack.c.b16 %v586, %v582
    %v911 = vpack.c.b16 %v587, %v583
    %v912 = vpack.c.b16 %v592, %v588
    %v913 = vpack.c.b16 %v593, %v589
    %v914 = vpack.c.b16 %v594, %v590
    %v915 = vpack.c.b16 %v595, %v591
    %v916 = vpack.c.b16 %v600, %v596
    %v917 = vpack.c.b16 %v601, %v597
    %v918 = vpack.c.b16 %v602, %v598
    %v919 = vpack.c.b16 %v603, %v599
    %v920 = vpack.c.b16 %v608, %v604
    %v921 = vpack.c.b16 %v609, %v605
    %v922 = vpack.c.b16 %v610, %v606
    %v923 = vpack.c.b16 %v611, %v607
    %v924 = vpack.c.b16 %v616, %v612
    %v925 = vpack.c.b16 %v617, %v613
    %v926 = vpack.c.b16 %v618, %v614
    %v927 = vpack.c.b16 %v619, %v615
    %v928 = vpack.c.b16 %v624, %v620
    %v929 = vpack.c.b16 %v625, %v621
    %v930 = vpack.c.b16 %v626, %v622
    %v931 = vpack.c.b16 %v627, %v623
    %v932 = vpack.c.b16 %v632, %v628
    %v933 = vpack.c.b16 %v633, %v629
    %v934 = vpack.c.b16 %v634, %v630
    %v935 = vpack.c.b16 %v635, %v631
    %v936 = vpack.c.b16 %v640, %v636
    %v937 = vpack.c.b16 %v641, %v637
    %v938 = vpack.c.b16 %v642, %v638
    %v939 = vpack.c.b16 %v643, %v639
    %v940 = vpack.c.b16 %v648, %v644
    %v941 = vpack.c.b16 %v649, %v645
    %v942 = vpack.c.b16 %v650, %v646
    %v943 = vpack.c.b16 %v651, %v647
    %v944 = vpack.c.b16 %v656, %v652
    %v945 = vpack.c.b16 %v657, %v653
    %v946 = vpack.c.b16 %v658, %v654
    %v947 = vpack.c.b16 %v659, %v655
    %v948 = vpack.c.b16 %v664, %v660
    %v949 = vpack.c.b16 %v665, %v661
    %v950 = vpack.c.b16 %v666, %v662
    %v951 = vpack.c.b16 %v667, %v663
    %v952 = vpack.c.b16 %v672, %v668
    %v953 = vpack.c.b16 %v673, %v669
    %v954 = vpack.c.b16 %v674, %v670
    %v955 = vpack.c.b16 %v675, %v671
    %v956 = vpack.c.b16 %v680, %v676
    %v957 = vpack.c.b16 %v681, %v677
    %v958 = vpack.c.b16 %v682, %v678
    %v959 = vpack.c.b16 %v683, %v679
    %v960 = vpack.c.b16 %v688, %v684
    %v961 = vpack.c.b16 %v689, %v685
    %v962 = vpack.c.b16 %v690, %v686
    %v963 = vpack.c.b16 %v691, %v687
    %v964 = vpack.c.b16 %v696, %v692
    %v965 = vpack.c.b16 %v697, %v693
    %v966 = vpack.c.b16 %v698, %v694
    %v967 = vpack.c.b16 %v699, %v695
    %v968 = vpack.c.b16 %v704, %v700
    %v969 = vpack.c.b16 %v705, %v701
    %v970 = vpack.c.b16 %v706, %v702
    %v971 = vpack.c.b16 %v707, %v703
    %v972 = vpack.c.b16 %v712, %v708
    %v973 = vpack.c.b16 %v713, %v709
    %v974 = vpack.c.b16 %v714, %v710
    %v975 = vpack.c.b16 %v715, %v711
    %v976 = vpack.c.b16 %v720, %v716
    %v977 = vpack.c.b16 %v721, %v717
    %v978 = vpack.c.b16 %v722, %v718
    %v979 = vpack.c.b16 %v723, %v719
    %v980 = vpack.c.b16 %v728, %v724
    %v981 = vpack.c.b16 %v729, %v725
    %v982 = vpack.c.b16 %v730, %v726
    %v983 = vpack.c.b16 %v731, %v727
    %v984 = vpack.c.b16 %v736, %v732
    %v985 = vpack.c.b16 %v737, %v733
    %v986 = vpack.c.b16 %v738, %v734
    %v987 = vpack.c.b16 %v739, %v735
    %v988 = vpack.c.b16 %v744, %v740
    %v989 = vpack.c.b16 %v745, %v741
    %v990 = vpack.c.b16 %v746, %v742
    %v991 = vpack.c.b16 %v747, %v743
    %v992 = vpack.c.b16 %v752, %v748
    %v993 = vpack.c.b16 %v753, %v749
    %v994 = vpack.c.b16 %v754, %v750
    %v995 = vpack.c.b16 %v755, %v751
    %v996 = vpack.c.b16 %v760, %v756
    %v997 = vpack.c.b16 %v761, %v757
    %v998 = vpack.c.b16 %v762, %v758
    %v999 = vpack.c.b16 %v763, %v759
    %v1000 = vpack.c.b16 %v768, %v764
    %v1001 = vpack.c.b16 %v769, %v765
    %v1002 = vpack.c.b16 %v770, %v766
    %v1003 = vpack.c.b16 %v771, %v767
    %v1004 = vpack.c.b16 %v776, %v772
    %v1005 = vpack.c.b16 %v777, %v773
    %v1006 = vpack.c.b16 %v778, %v774
    %v1007 = vpack.c.b16 %v779, %v775
    %v1008 = vpack.c.b16 %v784, %v780
    %v1009 = vpack.c.b16 %v785, %v781
    %v1010 = vpack.c.b16 %v786, %v782
    %v1011 = vpack.c.b16 %v787, %v783
    %v1012 = vpack.c.b16 %v792, %v788
    %v1013 = vpack.c.b16 %v793, %v789
    %v1014 = vpack.c.b16 %v794, %v790
    %v1015 = vpack.c.b16 %v795, %v791
    %v1016 = vpack.c.b16 %v800, %v796
    %v1017 = vpack.c.b16 %v801, %v797
    %v1018 = vpack.c.b16 %v802, %v798
    %v1019 = vpack.c.b16 %v803, %v799
    %v1020 = vpack.c.b16 %v808, %v804
    %v1021 = vpack.c.b16 %v809, %v805
    %v1022 = vpack.c.b16 %v810, %v806
    %v1023 = vpack.c.b16 %v811, %v807
    %v1024 = vpack.c.b16 %v816, %v812
    %v1025 = vpack.c.b16 %v817, %v813
    %v1026 = vpack.c.b16 %v818, %v814
    %v1027 = vpack.c.b16 %v819, %v815
    %v1028 = vpack.c.b16 %v824, %v820
    %v1029 = vpack.c.b16 %v825, %v821
    %v1030 = vpack.c.b16 %v826, %v822
    %v1031 = vpack.c.b16 %v827, %v823
    %v1032 = vpack.c.b16 %v832, %v828
    %v1033 = vpack.c.b16 %v833, %v829
    %v1034 = vpack.c.b16 %v834, %v830
    %v1035 = vpack.c.b16 %v835, %v831
    %v1036 = vpack.c.b16 %v840, %v836
    %v1037 = vpack.c.b16 %v841, %v837
    %v1038 = vpack.c.b16 %v842, %v838
    %v1039 = vpack.c.b16 %v843, %v839
    %v1040 = vpack.c.b16 %v848, %v844
    %v1041 = vpack.c.b16 %v849, %v845
    %v1042 = vpack.c.b16 %v850, %v846
    %v1043 = vpack.c.b16 %v851, %v847
    %1236 = vmatpush.bf16.msra.mxu0 %v880
    %1237 = vmatpush.bf16.msra.mxu0 %v876
    %1238 = vmatpush.bf16.msra.mxu0 %v872
    %1239 = vmatpush.bf16.msra.mxu0 %v868
    %1240 = vmatpush.bf16.msra.mxu0 %v864
    %1241 = vmatpush.bf16.msra.mxu0 %v860
    %1242 = vmatpush.bf16.msra.mxu0 %v856
    %1243 = vmatpush.bf16.msra.mxu0 %v852
    %1244 = vmatmul.bf16.gmra.mxu0 %v264
    %v1245 = vpop.f32.mrf.mxu0
    %v1246 = vadd.f32 %v238, %v1245
    %v1247 = vpop.f32.mrf.mxu0
    %v1248 = vadd.f32 %v238, %v1247
    %1249 = vdwg.mxu0
    %1250 = vmatpush.bf16.msra.mxu0 %v912
    %1251 = vmatpush.bf16.msra.mxu0 %v908
    %1252 = vmatpush.bf16.msra.mxu0 %v904
    %1253 = vmatpush.bf16.msra.mxu0 %v900
    %1254 = vmatpush.bf16.msra.mxu0 %v896
    %1255 = vmatpush.bf16.msra.mxu0 %v892
    %1256 = vmatpush.bf16.msra.mxu0 %v888
    %1257 = vmatpush.bf16.msra.mxu0 %v884
    %1258 = vmatmul.bf16.gmra.mxu0 %v265
    %v1259 = vpop.f32.mrf.mxu0
    %v1260 = vadd.f32 %v1246, %v1259
    %v1261 = vpop.f32.mrf.mxu0
    %v1262 = vadd.f32 %v1248, %v1261
    %1263 = vdwg.mxu0
    %1264 = vmatpush.bf16.msra.mxu0 %v944
    %1265 = vmatpush.bf16.msra.mxu0 %v940
    %1266 = vmatpush.bf16.msra.mxu0 %v936
    %1267 = vmatpush.bf16.msra.mxu0 %v932
    %1268 = vmatpush.bf16.msra.mxu0 %v928
    %1269 = vmatpush.bf16.msra.mxu0 %v924
    %1270 = vmatpush.bf16.msra.mxu0 %v920
    %1271 = vmatpush.bf16.msra.mxu0 %v916
    %1272 = vmatmul.bf16.gmra.mxu0 %v266
    %v1273 = vpop.f32.mrf.mxu0
    %v1274 = vadd.f32 %v1260, %v1273
    %v1275 = vpop.f32.mrf.mxu0
    %v1276 = vadd.f32 %v1262, %v1275
    %1277 = vdwg.mxu0
    %1278 = vmatpush.bf16.msra.mxu0 %v976
    %1279 = vmatpush.bf16.msra.mxu0 %v972
    %1280 = vmatpush.bf16.msra.mxu0 %v968
    %1281 = vmatpush.bf16.msra.mxu0 %v964
    %1282 = vmatpush.bf16.msra.mxu0 %v960
    %1283 = vmatpush.bf16.msra.mxu0 %v956
    %1284 = vmatpush.bf16.msra.mxu0 %v952
    %1285 = vmatpush.bf16.msra.mxu0 %v948
    %1286 = vmatmul.bf16.gmra.mxu0 %v267
    %v1287 = vpop.f32.mrf.mxu0
    %v1288 = vadd.f32 %v1274, %v1287
    %v1289 = vpop.f32.mrf.mxu0
    %v1290 = vadd.f32 %v1276, %v1289
    %1291 = vdwg.mxu0
    %1292 = vmatpush.bf16.msra.mxu0 %v1008
    %1293 = vmatpush.bf16.msra.mxu0 %v1004
    %1294 = vmatpush.bf16.msra.mxu0 %v1000
    %1295 = vmatpush.bf16.msra.mxu0 %v996
    %1296 = vmatpush.bf16.msra.mxu0 %v992
    %1297 = vmatpush.bf16.msra.mxu0 %v988
    %1298 = vmatpush.bf16.msra.mxu0 %v984
    %1299 = vmatpush.bf16.msra.mxu0 %v980
    %1300 = vmatmul.bf16.gmra.mxu0 %v268
    %v1301 = vpop.f32.mrf.mxu0
    %v1302 = vadd.f32 %v1288, %v1301
    %v1303 = vpop.f32.mrf.mxu0
    %v1304 = vadd.f32 %v1290, %v1303
    %1305 = vdwg.mxu0
    %1306 = vmatpush.bf16.msra.mxu0 %v1040
    %1307 = vmatpush.bf16.msra.mxu0 %v1036
    %1308 = vmatpush.bf16.msra.mxu0 %v1032
    %1309 = vmatpush.bf16.msra.mxu0 %v1028
    %1310 = vmatpush.bf16.msra.mxu0 %v1024
    %1311 = vmatpush.bf16.msra.mxu0 %v1020
    %1312 = vmatpush.bf16.msra.mxu0 %v1016
    %1313 = vmatpush.bf16.msra.mxu0 %v1012
    %1314 = vmatmul.bf16.gmra.mxu0 %v269
    %v1315 = vpop.f32.mrf.mxu0
    %v1316 = vadd.f32 %v1302, %v1315
    %v1317 = vpop.f32.mrf.mxu0
    %v1318 = vadd.f32 %v1304, %v1317
    %1319 = vdwg.mxu0
    %1320 = vmatpush.bf16.msra.mxu0 %v881
    %1321 = vmatpush.bf16.msra.mxu0 %v877
    %1322 = vmatpush.bf16.msra.mxu0 %v873
    %1323 = vmatpush.bf16.msra.mxu0 %v869
    %1324 = vmatpush.bf16.msra.mxu0 %v865
    %1325 = vmatpush.bf16.msra.mxu0 %v861
    %1326 = vmatpush.bf16.msra.mxu0 %v857
    %1327 = vmatpush.bf16.msra.mxu0 %v853
    %1328 = vmatmul.bf16.gmra.mxu0 %v264
    %v1329 = vpop.f32.mrf.mxu0
    %v1330 = vadd.f32 %v239, %v1329
    %v1331 = vpop.f32.mrf.mxu0
    %v1332 = vadd.f32 %v239, %v1331
    %1333 = vdwg.mxu0
    %1334 = vmatpush.bf16.msra.mxu0 %v913
    %1335 = vmatpush.bf16.msra.mxu0 %v909
    %1336 = vmatpush.bf16.msra.mxu0 %v905
    %1337 = vmatpush.bf16.msra.mxu0 %v901
    %1338 = vmatpush.bf16.msra.mxu0 %v897
    %1339 = vmatpush.bf16.msra.mxu0 %v893
    %1340 = vmatpush.bf16.msra.mxu0 %v889
    %1341 = vmatpush.bf16.msra.mxu0 %v885
    %1342 = vmatmul.bf16.gmra.mxu0 %v265
    %v1343 = vpop.f32.mrf.mxu0
    %v1344 = vadd.f32 %v1330, %v1343
    %v1345 = vpop.f32.mrf.mxu0
    %v1346 = vadd.f32 %v1332, %v1345
    %1347 = vdwg.mxu0
    %1348 = vmatpush.bf16.msra.mxu0 %v945
    %1349 = vmatpush.bf16.msra.mxu0 %v941
    %1350 = vmatpush.bf16.msra.mxu0 %v937
    %1351 = vmatpush.bf16.msra.mxu0 %v933
    %1352 = vmatpush.bf16.msra.mxu0 %v929
    %1353 = vmatpush.bf16.msra.mxu0 %v925
    %1354 = vmatpush.bf16.msra.mxu0 %v921
    %1355 = vmatpush.bf16.msra.mxu0 %v917
    %1356 = vmatmul.bf16.gmra.mxu0 %v266
    %v1357 = vpop.f32.mrf.mxu0
    %v1358 = vadd.f32 %v1344, %v1357
    %v1359 = vpop.f32.mrf.mxu0
    %v1360 = vadd.f32 %v1346, %v1359
    %1361 = vdwg.mxu0
    %1362 = vmatpush.bf16.msra.mxu0 %v977
    %1363 = vmatpush.bf16.msra.mxu0 %v973
    %1364 = vmatpush.bf16.msra.mxu0 %v969
    %1365 = vmatpush.bf16.msra.mxu0 %v965
    %1366 = vmatpush.bf16.msra.mxu0 %v961
    %1367 = vmatpush.bf16.msra.mxu0 %v957
    %1368 = vmatpush.bf16.msra.mxu0 %v953
    %1369 = vmatpush.bf16.msra.mxu0 %v949
    %1370 = vmatmul.bf16.gmra.mxu0 %v267
    %v1371 = vpop.f32.mrf.mxu0
    %v1372 = vadd.f32 %v1358, %v1371
    %v1373 = vpop.f32.mrf.mxu0
    %v1374 = vadd.f32 %v1360, %v1373
    %1375 = vdwg.mxu0
    %1376 = vmatpush.bf16.msra.mxu0 %v1009
    %1377 = vmatpush.bf16.msra.mxu0 %v1005
    %1378 = vmatpush.bf16.msra.mxu0 %v1001
    %1379 = vmatpush.bf16.msra.mxu0 %v997
    %1380 = vmatpush.bf16.msra.mxu0 %v993
    %1381 = vmatpush.bf16.msra.mxu0 %v989
    %1382 = vmatpush.bf16.msra.mxu0 %v985
    %1383 = vmatpush.bf16.msra.mxu0 %v981
    %1384 = vmatmul.bf16.gmra.mxu0 %v268
    %v1385 = vpop.f32.mrf.mxu0
    %v1386 = vadd.f32 %v1372, %v1385
    %v1387 = vpop.f32.mrf.mxu0
    %v1388 = vadd.f32 %v1374, %v1387
    %1389 = vdwg.mxu0
    %1390 = vmatpush.bf16.msra.mxu0 %v1041
    %1391 = vmatpush.bf16.msra.mxu0 %v1037
    %1392 = vmatpush.bf16.msra.mxu0 %v1033
    %1393 = vmatpush.bf16.msra.mxu0 %v1029
    %1394 = vmatpush.bf16.msra.mxu0 %v1025
    %1395 = vmatpush.bf16.msra.mxu0 %v1021
    %1396 = vmatpush.bf16.msra.mxu0 %v1017
    %1397 = vmatpush.bf16.msra.mxu0 %v1013
    %1398 = vmatmul.bf16.gmra.mxu0 %v269
    %v1399 = vpop.f32.mrf.mxu0
    %v1400 = vadd.f32 %v1386, %v1399
    %v1401 = vpop.f32.mrf.mxu0
    %v1402 = vadd.f32 %v1388, %v1401
    %1403 = vdwg.mxu0
    %1404 = vmatpush.bf16.msra.mxu0 %v882
    %1405 = vmatpush.bf16.msra.mxu0 %v878
    %1406 = vmatpush.bf16.msra.mxu0 %v874
    %1407 = vmatpush.bf16.msra.mxu0 %v870
    %1408 = vmatpush.bf16.msra.mxu0 %v866
    %1409 = vmatpush.bf16.msra.mxu0 %v862
    %1410 = vmatpush.bf16.msra.mxu0 %v858
    %1411 = vmatpush.bf16.msra.mxu0 %v854
    %1412 = vmatmul.bf16.gmra.mxu0 %v264
    %v1413 = vpop.f32.mrf.mxu0
    %v1414 = vadd.f32 %v240, %v1413
    %v1415 = vpop.f32.mrf.mxu0
    %v1416 = vadd.f32 %v240, %v1415
    %1417 = vdwg.mxu0
    %1418 = vmatpush.bf16.msra.mxu0 %v914
    %1419 = vmatpush.bf16.msra.mxu0 %v910
    %1420 = vmatpush.bf16.msra.mxu0 %v906
    %1421 = vmatpush.bf16.msra.mxu0 %v902
    %1422 = vmatpush.bf16.msra.mxu0 %v898
    %1423 = vmatpush.bf16.msra.mxu0 %v894
    %1424 = vmatpush.bf16.msra.mxu0 %v890
    %1425 = vmatpush.bf16.msra.mxu0 %v886
    %1426 = vmatmul.bf16.gmra.mxu0 %v265
    %v1427 = vpop.f32.mrf.mxu0
    %v1428 = vadd.f32 %v1414, %v1427
    %v1429 = vpop.f32.mrf.mxu0
    %v1430 = vadd.f32 %v1416, %v1429
    %1431 = vdwg.mxu0
    %1432 = vmatpush.bf16.msra.mxu0 %v946
    %1433 = vmatpush.bf16.msra.mxu0 %v942
    %1434 = vmatpush.bf16.msra.mxu0 %v938
    %1435 = vmatpush.bf16.msra.mxu0 %v934
    %1436 = vmatpush.bf16.msra.mxu0 %v930
    %1437 = vmatpush.bf16.msra.mxu0 %v926
    %1438 = vmatpush.bf16.msra.mxu0 %v922
    %1439 = vmatpush.bf16.msra.mxu0 %v918
    %1440 = vmatmul.bf16.gmra.mxu0 %v266
    %v1441 = vpop.f32.mrf.mxu0
    %v1442 = vadd.f32 %v1428, %v1441
    %v1443 = vpop.f32.mrf.mxu0
    %v1444 = vadd.f32 %v1430, %v1443
    %1445 = vdwg.mxu0
    %1446 = vmatpush.bf16.msra.mxu0 %v978
    %1447 = vmatpush.bf16.msra.mxu0 %v974
    %1448 = vmatpush.bf16.msra.mxu0 %v970
    %1449 = vmatpush.bf16.msra.mxu0 %v966
    %1450 = vmatpush.bf16.msra.mxu0 %v962
    %1451 = vmatpush.bf16.msra.mxu0 %v958
    %1452 = vmatpush.bf16.msra.mxu0 %v954
    %1453 = vmatpush.bf16.msra.mxu0 %v950
    %1454 = vmatmul.bf16.gmra.mxu0 %v267
    %v1455 = vpop.f32.mrf.mxu0
    %v1456 = vadd.f32 %v1442, %v1455
    %v1457 = vpop.f32.mrf.mxu0
    %v1458 = vadd.f32 %v1444, %v1457
    %1459 = vdwg.mxu0
    %1460 = vmatpush.bf16.msra.mxu0 %v1010
    %1461 = vmatpush.bf16.msra.mxu0 %v1006
    %1462 = vmatpush.bf16.msra.mxu0 %v1002
    %1463 = vmatpush.bf16.msra.mxu0 %v998
    %1464 = vmatpush.bf16.msra.mxu0 %v994
    %1465 = vmatpush.bf16.msra.mxu0 %v990
    %1466 = vmatpush.bf16.msra.mxu0 %v986
    %1467 = vmatpush.bf16.msra.mxu0 %v982
    %1468 = vmatmul.bf16.gmra.mxu0 %v268
    %v1469 = vpop.f32.mrf.mxu0
    %v1470 = vadd.f32 %v1456, %v1469
    %v1471 = vpop.f32.mrf.mxu0
    %v1472 = vadd.f32 %v1458, %v1471
    %1473 = vdwg.mxu0
    %1474 = vmatpush.bf16.msra.mxu0 %v1042
    %1475 = vmatpush.bf16.msra.mxu0 %v1038
    %1476 = vmatpush.bf16.msra.mxu0 %v1034
    %1477 = vmatpush.bf16.msra.mxu0 %v1030
    %1478 = vmatpush.bf16.msra.mxu0 %v1026
    %1479 = vmatpush.bf16.msra.mxu0 %v1022
    %1480 = vmatpush.bf16.msra.mxu0 %v1018
    %1481 = vmatpush.bf16.msra.mxu0 %v1014
    %1482 = vmatmul.bf16.gmra.mxu0 %v269
    %v1483 = vpop.f32.mrf.mxu0
    %v1484 = vadd.f32 %v1470, %v1483
    %v1485 = vpop.f32.mrf.mxu0
    %v1486 = vadd.f32 %v1472, %v1485
    %1487 = vdwg.mxu0
    %1488 = vmatpush.bf16.msra.mxu0 %v883
    %1489 = vmatpush.bf16.msra.mxu0 %v879
    %1490 = vmatpush.bf16.msra.mxu0 %v875
    %1491 = vmatpush.bf16.msra.mxu0 %v871
    %1492 = vmatpush.bf16.msra.mxu0 %v867
    %1493 = vmatpush.bf16.msra.mxu0 %v863
    %1494 = vmatpush.bf16.msra.mxu0 %v859
    %1495 = vmatpush.bf16.msra.mxu0 %v855
    %1496 = vmatmul.bf16.gmra.mxu0 %v264
    %v1497 = vpop.f32.mrf.mxu0
    %v1498 = vadd.f32 %v241, %v1497
    %v1499 = vpop.f32.mrf.mxu0
    %v1500 = vadd.f32 %v241, %v1499
    %1501 = vdwg.mxu0
    %1502 = vmatpush.bf16.msra.mxu0 %v915
    %1503 = vmatpush.bf16.msra.mxu0 %v911
    %1504 = vmatpush.bf16.msra.mxu0 %v907
    %1505 = vmatpush.bf16.msra.mxu0 %v903
    %1506 = vmatpush.bf16.msra.mxu0 %v899
    %1507 = vmatpush.bf16.msra.mxu0 %v895
    %1508 = vmatpush.bf16.msra.mxu0 %v891
    %1509 = vmatpush.bf16.msra.mxu0 %v887
    %1510 = vmatmul.bf16.gmra.mxu0 %v265
    %v1511 = vpop.f32.mrf.mxu0
    %v1512 = vadd.f32 %v1498, %v1511
    %v1513 = vpop.f32.mrf.mxu0
    %v1514 = vadd.f32 %v1500, %v1513
    %1515 = vdwg.mxu0
    %1516 = vmatpush.bf16.msra.mxu0 %v947
    %1517 = vmatpush.bf16.msra.mxu0 %v943
    %1518 = vmatpush.bf16.msra.mxu0 %v939
    %1519 = vmatpush.bf16.msra.mxu0 %v935
    %1520 = vmatpush.bf16.msra.mxu0 %v931
    %1521 = vmatpush.bf16.msra.mxu0 %v927
    %1522 = vmatpush.bf16.msra.mxu0 %v923
    %1523 = vmatpush.bf16.msra.mxu0 %v919
    %1524 = vmatmul.bf16.gmra.mxu0 %v266
    %v1525 = vpop.f32.mrf.mxu0
    %v1526 = vadd.f32 %v1512, %v1525
    %v1527 = vpop.f32.mrf.mxu0
    %v1528 = vadd.f32 %v1514, %v1527
    %1529 = vdwg.mxu0
    %1530 = vmatpush.bf16.msra.mxu0 %v979
    %1531 = vmatpush.bf16.msra.mxu0 %v975
    %1532 = vmatpush.bf16.msra.mxu0 %v971
    %1533 = vmatpush.bf16.msra.mxu0 %v967
    %1534 = vmatpush.bf16.msra.mxu0 %v963
    %1535 = vmatpush.bf16.msra.mxu0 %v959
    %1536 = vmatpush.bf16.msra.mxu0 %v955
    %1537 = vmatpush.bf16.msra.mxu0 %v951
    %1538 = vmatmul.bf16.gmra.mxu0 %v267
    %v1539 = vpop.f32.mrf.mxu0
    %v1540 = vadd.f32 %v1526, %v1539
    %v1541 = vpop.f32.mrf.mxu0
    %v1542 = vadd.f32 %v1528, %v1541
    %1543 = vdwg.mxu0
    %1544 = vmatpush.bf16.msra.mxu0 %v1011
    %1545 = vmatpush.bf16.msra.mxu0 %v1007
    %1546 = vmatpush.bf16.msra.mxu0 %v1003
    %1547 = vmatpush.bf16.msra.mxu0 %v999
    %1548 = vmatpush.bf16.msra.mxu0 %v995
    %1549 = vmatpush.bf16.msra.mxu0 %v991
    %1550 = vmatpush.bf16.msra.mxu0 %v987
    %1551 = vmatpush.bf16.msra.mxu0 %v983
    %1552 = vmatmul.bf16.gmra.mxu0 %v268
    %v1553 = vpop.f32.mrf.mxu0
    %v1554 = vadd.f32 %v1540, %v1553
    %v1555 = vpop.f32.mrf.mxu0
    %v1556 = vadd.f32 %v1542, %v1555
    %1557 = vdwg.mxu0
    %1558 = vmatpush.bf16.msra.mxu0 %v1043
    %1559 = vmatpush.bf16.msra.mxu0 %v1039
    %1560 = vmatpush.bf16.msra.mxu0 %v1035
    %1561 = vmatpush.bf16.msra.mxu0 %v1031
    %1562 = vmatpush.bf16.msra.mxu0 %v1027
    %1563 = vmatpush.bf16.msra.mxu0 %v1023
    %1564 = vmatpush.bf16.msra.mxu0 %v1019
    %1565 = vmatpush.bf16.msra.mxu0 %v1015
    %1566 = vmatmul.bf16.gmra.mxu0 %v269
    %v1567 = vpop.f32.mrf.mxu0
    %v1568 = vadd.f32 %v1554, %v1567
    %v1569 = vpop.f32.mrf.mxu0
    %v1570 = vadd.f32 %v1556, %v1569
    %1571 = vdwg.mxu0
    %v1572 = vmax.f32 %v1316, 0.0
    %v1573 = vmax.f32 %v1400, 0.0
    %v1574 = vmax.f32 %v1484, 0.0
    %v1575 = vmax.f32 %v1568, 0.0
    %v1576 = vmax.f32 %v1318, 0.0
    %v1577 = vmax.f32 %v1402, 0.0
    %v1578 = vmax.f32 %v1486, 0.0
    %v1579 = vmax.f32 %v1570, 0.0
    %v1580 = vld [vmem:[%s3] sm:$0xf]
    %v1582 = vperm.slane %v1580, 0
    %v1583 = vperm.slane %v1580, 1
    %v1584 = vperm.slane %v1580, 2
    %v1585 = vperm.slane %v1580, 3
    %v1590 = vmul.f32 %v1572, %v1582
    %v1591 = vmul.f32 %v1573, %v1583
    %v1592 = vmul.f32 %v1574, %v1584
    %v1593 = vmul.f32 %v1575, %v1585
    %v1594 = vmul.f32 %v1576, %v1582
    %v1595 = vmul.f32 %v1577, %v1583
    %v1596 = vmul.f32 %v1578, %v1584
    %v1597 = vmul.f32 %v1579, %v1585
    %v1598 = vadd.f32 %v1590, %v1591
    %v1599 = vadd.f32 %v1598, %v1592
    %v1600 = vadd.f32 %v1599, %v1593
    %1601 = vadd.xlane.f32.xlu0 %v1600
    %v1602 = vpop.xlane.xlu0 %1601
    %v1603 = vadd.f32 %v1594, %v1595
    %v1604 = vadd.f32 %v1603, %v1596
    %v1605 = vadd.f32 %v1604, %v1597
    %1606 = vadd.xlane.f32.xlu0 %v1605
    %v1607 = vpop.xlane.xlu0 %1606
    %1608 = vxpose.xlu0.b32.start [1/16] %v1602, 128
    %1609 = vxpose.xlu0.b32.cont [2/16] %v1607, 128
    %1610 = vxpose.xlu0.b32.cont [3/16] 0.0, 128
    %1611 = vxpose.xlu0.b32.cont [4/16] 0.0, 128
    %1612 = vxpose.xlu0.b32.cont [5/16] 0.0, 128
    %1613 = vxpose.xlu0.b32.cont [6/16] 0.0, 128
    %1614 = vxpose.xlu0.b32.cont [7/16] 0.0, 128
    %1615 = vxpose.xlu0.b32.cont [8/16] 0.0, 128
    %1616 = vxpose.xlu0.b32.cont [9/16] 0.0, 128
    %1617 = vxpose.xlu0.b32.cont [10/16] 0.0, 128
    %1618 = vxpose.xlu0.b32.cont [11/16] 0.0, 128
    %1619 = vxpose.xlu0.b32.cont [12/16] 0.0, 128
    %1620 = vxpose.xlu0.b32.cont [13/16] 0.0, 128
    %1621 = vxpose.xlu0.b32.cont [14/16] 0.0, 128
    %1622 = vxpose.xlu0.b32.cont [15/16] 0.0, 128
    %1623 = vxpose.xlu0.b32.end [16/16] 0.0, 128
    %v1624 = vpop.trf.xlu0
    %v1625 = vpop.trf.xlu0
    %v1626 = vpop.trf.xlu0
    %v1627 = vpop.trf.xlu0
    %v1628 = vpop.trf.xlu0
    %v1629 = vpop.trf.xlu0
    %v1630 = vpop.trf.xlu0
    %v1631 = vpop.trf.xlu0
    %v1632 = vpop.trf.xlu0
    %v1633 = vpop.trf.xlu0
    %v1634 = vpop.trf.xlu0
    %v1635 = vpop.trf.xlu0
    %v1636 = vpop.trf.xlu0
    %v1637 = vpop.trf.xlu0
    %v1638 = vpop.trf.xlu0
    %v1639 = vpop.trf.xlu0
    %v1640 = vld [vmem:[#allocation2] sm:$0x1]
    %1642 = vset.pattern.permute.xlu0 0
    %1643 = vperm.xlu0 %1642, %v1640
    %v1644 = vpop.permute.xlu0 %1643
    %v1646 = vperm.slane %v1644, 0
    %v1647 = vadd.f32 %v1624, %v1646
    %vm1648 = vcmask 122880
    %1649 = vst.msk [vmem:[%s5] sm:$0x1] %vm1648, %v1647
    // Predicated region
    $region26: #{critic_forward.1} parent=1 // pred_check
      _
    $region27: #{critic_forward.1} parent=1 // pred_check_branch
      %1651 = sbr.rel (0) target = $region29
    $region28: #{critic_forward.1} parent=1 // pred_region
      _
    $region29: #{critic_forward.1} parent=1 // pred_fallthru
      _
    // Predicated region
    $region30: #{critic_forward.1} parent=1 // pred_check
      _
    $region31: #{critic_forward.1} parent=1 // pred_check_branch
      %1653 = sbr.rel (0) target = $region33
    $region32: #{critic_forward.1} parent=1 // pred_region
      _
    $region33: #{critic_forward.1} parent=1 // pred_fallthru
      _
    %1654 = vsyncpa [#allocation4], 1

</llo_original>
